<compile_context>
chip_gen: v5e
topology: v5e:2x2
jax: 0.10.0
libtpu: 0.0.40
codegen_flags: <defaults>
</compile_context>

<pallas_src>
import jax
import jax.numpy as jnp
from jax import lax
from jax.experimental import pallas as pl
from jax.experimental.pallas import tpu as pltpu

THRESH = 0.5
MARGIN = 0.1        # unused in the PyTorch forward, kept for parity
SCALE_POS = 2.0
SCALE_NEG = 40.0
IGNORE_LABEL = 141


def _round_up(x, m):
    return ((x + m - 1) // m) * m


def _msl_kernel(a_ref, b_ref, gi_ref, gj_ref, out_ref,
                psum_ref, pcnt_ref, nsum_ref, ncnt_ref):
    # a_ref:  (TM, Dp)   row block of emb
    # b_ref:  (TN, Dp)   col block of emb
    # gi_ref: (TM, 1)    labels of the row block (int32)
    # gj_ref: (1, TN)    labels of the col block (int32)
    # out_ref:(4, TN)    per-row-block lane-partials [sum_p, cnt_p, sum_n, cnt_n]
    # scratch: four (1, TN) f32 lane-partial accumulators
    i = pl.program_id(0)
    j = pl.program_id(1)

    @pl.when(j == 0)
    def _():
        psum_ref[...] = jnp.zeros_like(psum_ref)
        pcnt_ref[...] = jnp.zeros_like(pcnt_ref)
        nsum_ref[...] = jnp.zeros_like(nsum_ref)
        ncnt_ref[...] = jnp.zeros_like(ncnt_ref)

    # (TM, Dp) x (TN, Dp) -> (TM, TN); contract the shared embedding dim on the
    # MXU directly -- no transpose of emb is ever materialized.
    s = lax.dot_general(
        a_ref[...], b_ref[...],
        dimension_numbers=(((1,), (1,)), ((), ())),
        preferred_element_type=jnp.float32,
    )

    gi = gi_ref[...]                                           # (TM, 1)
    gj = gj_ref[...]                                           # (1, TN)
    z = jnp.logical_and(gi == gj, gi != IGNORE_LABEL)          # (TM, TN)
    s_pos = s > 0.0

    # Single EUP exp per element; derive both scaled exponentials cheaply.
    t = jnp.exp(s - THRESH)
    t2 = t * t
    t4 = t2 * t2
    t8 = t4 * t4
    t16 = t8 * t8
    t32 = t16 * t16
    exp_n = t32 * t8                          # exp(+SCALE_NEG * (s - thresh)), VPU chain
    exp_p = pl.reciprocal(t2, approx=True)    # exp(-SCALE_POS * (s - thresh)), EUP vrcp

    # Negatives: z == 0 and s > 0 (diagonal of ignored rows included, as in torch).
    neg_sel = jnp.logical_and(jnp.logical_not(z), s_pos)
    nsum_ref[...] += jnp.sum(jnp.where(neg_sel, exp_n, 0.0), axis=0, keepdims=True)
    ncnt_ref[...] += jnp.sum(neg_sel.astype(jnp.float32), axis=0, keepdims=True)

    # Positives: z == 1, s > 0, off-diagonal.
    pos_base = jnp.logical_and(z, s_pos)

    def _pos_accumulate(pos_sel):
        psum_ref[...] += jnp.sum(jnp.where(pos_sel, exp_p, 0.0), axis=0, keepdims=True)
        pcnt_ref[...] += jnp.sum(pos_sel.astype(jnp.float32), axis=0, keepdims=True)

    @pl.when(i == j)
    def _():
        # Only diagonal tiles contain global-diagonal entries; build iotas here only.
        lrow = lax.broadcasted_iota(jnp.int32, s.shape, 0)
        lcol = lax.broadcasted_iota(jnp.int32, s.shape, 1)
        _pos_accumulate(jnp.logical_and(pos_base, lrow != lcol))

    @pl.when(i != j)
    def _():
        _pos_accumulate(pos_base)

    # Write the lane-partials for this row block once, after the last col block.
    @pl.when(j == pl.num_programs(1) - 1)
    def _():
        out_ref[0:1, :] = psum_ref[...]
        out_ref[1:2, :] = pcnt_ref[...]
        out_ref[2:3, :] = nsum_ref[...]
        out_ref[3:4, :] = ncnt_ref[...]


def multi_similarity_loss2(emb_img, gt_pre, *, tile=256, matmul_dtype=None):
    """Pallas TPU implementation of MultiSimilarityLoss2.forward.

    matmul_dtype: optionally jnp.bfloat16 to use the bf16 MXU path on v6e/v7x.
      Default keeps f32 inputs because scale_neg=40 amplifies similarity
      rounding error exponentially.
    """
    emb = jnp.asarray(emb_img, jnp.float32)
    gt = jnp.asarray(gt_pre, jnp.int32)
    n, d = emb.shape

    # MXU/lane-aligned tiles; pad N and D.
    tile = max(128, (int(tile) // 128) * 128)
    tm = tn = min(tile, _round_up(n, 128))
    n_pad = _round_up(n, tm)
    d_pad = _round_up(d, 128)
    num_i = n_pad // tm
    num_j = n_pad // tn

    # Padded embedding rows are exactly zero -> their similarities are exactly
    # 0.0 and fail the strict `s > 0` test; padded labels are the ignore label
    # so they can never form a positive pair either.
    emb_p = jnp.pad(emb, ((0, n_pad - n), (0, d_pad - d)))
    gt_p = jnp.pad(gt, (0, n_pad - n), constant_values=IGNORE_LABEL)
    gt_col = gt_p.reshape(n_pad, 1)
    gt_row = gt_p.reshape(1, n_pad)

    a_in = emb_p if matmul_dtype is None else emb_p.astype(matmul_dtype)

    itemsize = jnp.dtype(a_in.dtype).itemsize
    cost = pl.CostEstimate(
        flops=2 * n_pad * n_pad * d_pad,
        transcendentals=n_pad * n_pad,
        bytes_accessed=(num_i + num_i * num_j) * tm * d_pad * itemsize
        + 2 * n_pad * 4
        + num_i * 4 * tn * 4,
    )

    parts = pl.pallas_call(
        _msl_kernel,
        out_shape=jax.ShapeDtypeStruct((num_i, 4, tn), jnp.float32),
        grid=(num_i, num_j),
        in_specs=[
            pl.BlockSpec((tm, d_pad), lambda i, j: (i, 0)),   # row block of emb
            pl.BlockSpec((tn, d_pad), lambda i, j: (j, 0)),   # col block of emb
            pl.BlockSpec((tm, 1), lambda i, j: (i, 0)),       # labels (column)
            pl.BlockSpec((1, tn), lambda i, j: (0, j)),       # labels (row)
        ],
        out_specs=pl.BlockSpec((None, 4, tn), lambda i, j: (i, 0, 0)),
        scratch_shapes=[pltpu.VMEM((1, tn), jnp.float32) for _ in range(4)],
        compiler_params=pltpu.CompilerParams(
            dimension_semantics=("parallel", "arbitrary"),
            vmem_limit_bytes=32 * 1024 * 1024,
        ),
        cost_estimate=cost,
    )(a_in, a_in, gt_col, gt_row)

    # Final cross-lane / cross-row-block collapse, done once on a tiny array.
    stats = jnp.sum(parts, axis=(0, 2))                       # (4,)
    sum_p, cnt_p, sum_n, cnt_n = stats[0], stats[1], stats[2], stats[3]

    pos_loss = jnp.where(
        cnt_p > 0.0,
        (1.0 / SCALE_POS) * jnp.log1p(sum_p) / jnp.maximum(cnt_p, 1.0),
        0.0,
    )
    neg_loss = jnp.where(
        cnt_n > 0.0,
        (1.0 / SCALE_NEG) * jnp.log1p(sum_n) / jnp.maximum(cnt_n, 1.0),
        0.0,
    )
    # PyTorch's "if loss == 0: return zeros([])" is value-identical to pos+neg.
    return pos_loss + neg_loss


def _reference(emb, gt):
    """Pure-JAX reference matching the PyTorch forward (for the self-check)."""
    emb = emb.astype(jnp.float32)
    m = emb @ emb.T
    nn_ = emb.shape[0]
    z = (gt[:, None] == gt[None, :]) & (gt[:, None] != IGNORE_LABEL)
    off = ~jnp.eye(nn_, dtype=bool)
    pos = z & off & (m > 0)
    neg = (~z) & (m > 0)
    cp = jnp.sum(pos)
    cn = jnp.sum(neg)
    sp = jnp.sum(jnp.where(pos, jnp.exp(-SCALE_POS * (m - THRESH)), 0.0))
    sn = jnp.sum(jnp.where(neg, jnp.exp(SCALE_NEG * (m - THRESH)), 0.0))
    pl_ = jnp.where(cp > 0, (1.0 / SCALE_POS) * jnp.log1p(sp) / jnp.maximum(cp, 1), 0.0)
    nl_ = jnp.where(cn > 0, (1.0 / SCALE_NEG) * jnp.log1p(sn) / jnp.maximum(cn, 1), 0.0)
    return pl_ + nl_


if __name__ == "__main__":
    key = jax.random.PRNGKey(0)
    k_emb, _ = jax.random.split(key)

    N, D = 8, 32  # small batch of embeddings
    emb = jax.random.normal(k_emb, (N, D), dtype=jnp.float32)
    # L2-normalize like typical metric-learning embeddings (keeps sims in [-1, 1])
    emb = emb / jnp.linalg.norm(emb, axis=-1, keepdims=True)

    # labels include repeats (positive pairs) and the ignore label 141
    labels = jnp.array([0, 0, 1, 1, 2, 141, 2, 3], dtype=jnp.int32)

    loss = multi_similarity_loss2(emb, labels)
    jax.block_until_ready(loss)

    ref = _reference(emb, labels)
    assert loss.shape == () and bool(jnp.isfinite(loss))
    assert bool(jnp.allclose(loss, ref, rtol=2e-2, atol=1e-4)), (loss, ref)
    print("KERNEL_OK")
</pallas_src>

<mosaic_0001>
module attributes {stable_mosaic.version = 11 : i64} {
  func.func @_msl_kernel(%arg0: i32, %arg1: i32, %arg2: memref<128x128xf32, #tpu.memory_space<vmem>>, %arg3: memref<128x128xf32, #tpu.memory_space<vmem>>, %arg4: memref<128x1xi32, #tpu.memory_space<vmem>>, %arg5: memref<1x128xi32, #tpu.memory_space<vmem>>, %arg6: memref<1x4x128xf32, #tpu.memory_space<vmem>>, %arg7: memref<1x128xf32, #tpu.memory_space<vmem>>, %arg8: memref<1x128xf32, #tpu.memory_space<vmem>>, %arg9: memref<1x128xf32, #tpu.memory_space<vmem>>, %arg10: memref<1x128xf32, #tpu.memory_space<vmem>>) attributes {dimension_semantics = [#tpu.dimension_semantics<parallel>, #tpu.dimension_semantics<arbitrary>], iteration_bounds = array<i64: 1, 1>, scalar_prefetch = 0 : i64, scratch_operands = 4 : i64, tpu.core_type = #tpu.core_type<tc>, window_params = [{transform_indices = @transform_0, window_bounds = array<i64: 128, 128>}, {transform_indices = @transform_1, window_bounds = array<i64: 128, 128>}, {transform_indices = @transform_2, window_bounds = array<i64: 128, 1>}, {transform_indices = @transform_3, window_bounds = array<i64: 1, 128>}, {transform_indices = @transform_4, window_bounds = array<i64: 1, 4, 128>}]} {
    %c0_i32 = arith.constant 0 : i32
    %0 = arith.cmpi eq, %arg1, %c0_i32 : i32
    %1 = arith.extui %0 : i1 to i32
    %c0_i32_0 = arith.constant 0 : i32
    %2 = arith.cmpi ne, %1, %c0_i32_0 : i32
    scf.if %2 {
      %cst_26 = arith.constant 0.000000e+00 : f32
      %53 = vector.broadcast %cst_26 : f32 to vector<1x128xf32>
      %c0_27 = arith.constant 0 : index
      %c0_28 = arith.constant 0 : index
      %54 = vector.load %arg7[%c0_27, %c0_28] : memref<1x128xf32, #tpu.memory_space<vmem>>, vector<1x128xf32>
      tpu.vector_store %arg7[%c0_27, %c0_28], %53 {strides = array<i32>} : memref<1x128xf32, #tpu.memory_space<vmem>>, vector<1x128xf32>,
      %cst_29 = arith.constant 0.000000e+00 : f32
      %55 = vector.broadcast %cst_29 : f32 to vector<1x128xf32>
      %c0_30 = arith.constant 0 : index
      %c0_31 = arith.constant 0 : index
      %56 = vector.load %arg8[%c0_30, %c0_31] : memref<1x128xf32, #tpu.memory_space<vmem>>, vector<1x128xf32>
      tpu.vector_store %arg8[%c0_30, %c0_31], %55 {strides = array<i32>} : memref<1x128xf32, #tpu.memory_space<vmem>>, vector<1x128xf32>,
      %cst_32 = arith.constant 0.000000e+00 : f32
      %57 = vector.broadcast %cst_32 : f32 to vector<1x128xf32>
      %c0_33 = arith.constant 0 : index
      %c0_34 = arith.constant 0 : index
      %58 = vector.load %arg9[%c0_33, %c0_34] : memref<1x128xf32, #tpu.memory_space<vmem>>, vector<1x128xf32>
      tpu.vector_store %arg9[%c0_33, %c0_34], %57 {strides = array<i32>} : memref<1x128xf32, #tpu.memory_space<vmem>>, vector<1x128xf32>,
      %cst_35 = arith.constant 0.000000e+00 : f32
      %59 = vector.broadcast %cst_35 : f32 to vector<1x128xf32>
      %c0_36 = arith.constant 0 : index
      %c0_37 = arith.constant 0 : index
      %60 = vector.load %arg10[%c0_36, %c0_37] : memref<1x128xf32, #tpu.memory_space<vmem>>, vector<1x128xf32>
      tpu.vector_store %arg10[%c0_36, %c0_37], %59 {strides = array<i32>} : memref<1x128xf32, #tpu.memory_space<vmem>>, vector<1x128xf32>,
    } else {
    }
    %c0 = arith.constant 0 : index
    %c0_1 = arith.constant 0 : index
    %3 = vector.load %arg2[%c0, %c0_1] : memref<128x128xf32, #tpu.memory_space<vmem>>, vector<128x128xf32>
    %c0_2 = arith.constant 0 : index
    %c0_3 = arith.constant 0 : index
    %4 = vector.load %arg3[%c0_2, %c0_3] : memref<128x128xf32, #tpu.memory_space<vmem>>, vector<128x128xf32>
    %cst = arith.constant dense<0.000000e+00> : vector<128x128xf32>
    %5 = tpu.matmul %3, %4, %cst {dimension_numbers = #tpu.dot_dimension_numbers<[1], [1], [0], [0], [0, 0, 1, 0], [], []>} : vector<128x128xf32>, vector<128x128xf32>, vector<128x128xf32> -> vector<128x128xf32>
    %c0_4 = arith.constant 0 : index
    %c0_5 = arith.constant 0 : index
    %6 = vector.load %arg4[%c0_4, %c0_5] : memref<128x1xi32, #tpu.memory_space<vmem>>, vector<128x1xi32>
    %c0_6 = arith.constant 0 : index
    %c0_7 = arith.constant 0 : index
    %7 = vector.load %arg5[%c0_6, %c0_7] : memref<1x128xi32, #tpu.memory_space<vmem>>, vector<1x128xi32>
    %8 = vector.broadcast %6 : vector<128x1xi32> to vector<128x128xi32>
    %9 = vector.broadcast %7 : vector<1x128xi32> to vector<128x128xi32>
    %10 = arith.cmpi eq, %8, %9 : vector<128x128xi32>
    %c141_i32 = arith.constant 141 : i32
    %11 = vector.broadcast %c141_i32 : i32 to vector<128x1xi32>
    %12 = arith.cmpi ne, %6, %11 : vector<128x1xi32>
    %13 = vector.broadcast %12 : vector<128x1xi1> to vector<128x128xi1>
    %14 = arith.andi %10, %13 : vector<128x128xi1>
    %cst_8 = arith.constant 0.000000e+00 : f32
    %15 = vector.broadcast %cst_8 : f32 to vector<128x128xf32>
    %16 = arith.cmpf ogt, %5, %15 : vector<128x128xf32>
    %cst_9 = arith.constant 5.000000e-01 : f32
    %17 = vector.broadcast %cst_9 : f32 to vector<128x128xf32>
    %18 = arith.subf %5, %17 : vector<128x128xf32>
    %19 = math.exp %18 : vector<128x128xf32>
    %20 = arith.mulf %19, %19 : vector<128x128xf32>
    %21 = arith.mulf %20, %20 : vector<128x128xf32>
    %22 = arith.mulf %21, %21 : vector<128x128xf32>
    %23 = arith.mulf %22, %22 : vector<128x128xf32>
    %24 = arith.mulf %23, %23 : vector<128x128xf32>
    %25 = arith.mulf %24, %22 : vector<128x128xf32>
    %26 = tpu.reciprocal %20 {approx = true} : vector<128x128xf32> -> vector<128x128xf32>
    %cst_10 = arith.constant dense<true> : vector<128x128xi1>
    %27 = arith.xori %14, %cst_10 : vector<128x128xi1>
    %28 = arith.andi %27, %16 : vector<128x128xi1>
    %c0_11 = arith.constant 0 : index
    %c0_12 = arith.constant 0 : index
    %29 = vector.load %arg9[%c0_11, %c0_12] : memref<1x128xf32, #tpu.memory_space<vmem>>, vector<1x128xf32>
    %cst_13 = arith.constant 0.000000e+00 : f32
    %30 = vector.broadcast %cst_13 : f32 to vector<128x128xf32>
    %31 = arith.select %28, %25, %30 : vector<128x128xi1>, vector<128x128xf32>
    %cst_14 = arith.constant dense<0.000000e+00> : vector<128xf32>
    %32 = vector.multi_reduction <add>, %31, %cst_14 [0] : vector<128x128xf32> to vector<128xf32>
    %33 = vector.shape_cast %32 : vector<128xf32> to vector<1x128xf32>
    %34 = arith.addf %29, %33 : vector<1x128xf32>
    %c0_15 = arith.constant 0 : index
    %c0_16 = arith.constant 0 : index
    %35 = vector.load %arg9[%c0_15, %c0_16] : memref<1x128xf32, #tpu.memory_space<vmem>>, vector<1x128xf32>
    tpu.vector_store %arg9[%c0_15, %c0_16], %34 {strides = array<i32>} : memref<1x128xf32, #tpu.memory_space<vmem>>, vector<1x128xf32>,
    %c0_17 = arith.constant 0 : index
    %c0_18 = arith.constant 0 : index
    %36 = vector.load %arg10[%c0_17, %c0_18] : memref<1x128xf32, #tpu.memory_space<vmem>>, vector<1x128xf32>
    %37 = arith.extui %28 : vector<128x128xi1> to vector<128x128xi32>
    %38 = arith.sitofp %37 : vector<128x128xi32> to vector<128x128xf32>
    %cst_19 = arith.constant dense<0.000000e+00> : vector<128xf32>
    %39 = vector.multi_reduction <add>, %38, %cst_19 [0] : vector<128x128xf32> to vector<128xf32>
    %40 = vector.shape_cast %39 : vector<128xf32> to vector<1x128xf32>
    %41 = arith.addf %36, %40 : vector<1x128xf32>
    %c0_20 = arith.constant 0 : index
    %c0_21 = arith.constant 0 : index
    %42 = vector.load %arg10[%c0_20, %c0_21] : memref<1x128xf32, #tpu.memory_space<vmem>>, vector<1x128xf32>
    tpu.vector_store %arg10[%c0_20, %c0_21], %41 {strides = array<i32>} : memref<1x128xf32, #tpu.memory_space<vmem>>, vector<1x128xf32>,
    %43 = arith.andi %14, %16 : vector<128x128xi1>
    %44 = arith.cmpi eq, %arg0, %arg1 : i32
    %45 = arith.extui %44 : i1 to i32
    %c0_i32_22 = arith.constant 0 : i32
    %46 = arith.cmpi ne, %45, %c0_i32_22 : i32
    scf.if %46 {
      %53 = tpu.iota {dimensions = array<i32: 0>} : vector<128x128xi32>
      %54 = tpu.iota {dimensions = array<i32: 1>} : vector<128x128xi32>
      %55 = arith.cmpi ne, %53, %54 : vector<128x128xi32>
      %56 = arith.andi %43, %55 : vector<128x128xi1>
      %c0_26 = arith.constant 0 : index
      %c0_27 = arith.constant 0 : index
      %57 = vector.load %arg7[%c0_26, %c0_27] : memref<1x128xf32, #tpu.memory_space<vmem>>, vector<1x128xf32>
      %cst_28 = arith.constant 0.000000e+00 : f32
      %58 = vector.broadcast %cst_28 : f32 to vector<128x128xf32>
      %59 = arith.select %56, %26, %58 : vector<128x128xi1>, vector<128x128xf32>
      %cst_29 = arith.constant dense<0.000000e+00> : vector<128xf32>
      %60 = vector.multi_reduction <add>, %59, %cst_29 [0] : vector<128x128xf32> to vector<128xf32>
      %61 = vector.shape_cast %60 : vector<128xf32> to vector<1x128xf32>
      %62 = arith.addf %57, %61 : vector<1x128xf32>
      %c0_30 = arith.constant 0 : index
      %c0_31 = arith.constant 0 : index
      %63 = vector.load %arg7[%c0_30, %c0_31] : memref<1x128xf32, #tpu.memory_space<vmem>>, vector<1x128xf32>
      tpu.vector_store %arg7[%c0_30, %c0_31], %62 {strides = array<i32>} : memref<1x128xf32, #tpu.memory_space<vmem>>, vector<1x128xf32>,
      %c0_32 = arith.constant 0 : index
      %c0_33 = arith.constant 0 : index
      %64 = vector.load %arg8[%c0_32, %c0_33] : memref<1x128xf32, #tpu.memory_space<vmem>>, vector<1x128xf32>
      %65 = arith.extui %56 : vector<128x128xi1> to vector<128x128xi32>
      %66 = arith.sitofp %65 : vector<128x128xi32> to vector<128x128xf32>
      %cst_34 = arith.constant dense<0.000000e+00> : vector<128xf32>
      %67 = vector.multi_reduction <add>, %66, %cst_34 [0] : vector<128x128xf32> to vector<128xf32>
      %68 = vector.shape_cast %67 : vector<128xf32> to vector<1x128xf32>
      %69 = arith.addf %64, %68 : vector<1x128xf32>
      %c0_35 = arith.constant 0 : index
      %c0_36 = arith.constant 0 : index
      %70 = vector.load %arg8[%c0_35, %c0_36] : memref<1x128xf32, #tpu.memory_space<vmem>>, vector<1x128xf32>
      tpu.vector_store %arg8[%c0_35, %c0_36], %69 {strides = array<i32>} : memref<1x128xf32, #tpu.memory_space<vmem>>, vector<1x128xf32>,
    } else {
    }
    %47 = arith.cmpi ne, %arg0, %arg1 : i32
    %48 = arith.extui %47 : i1 to i32
    %c0_i32_23 = arith.constant 0 : i32
    %49 = arith.cmpi ne, %48, %c0_i32_23 : i32
    scf.if %49 {
      %c0_26 = arith.constant 0 : index
      %c0_27 = arith.constant 0 : index
      %53 = vector.load %arg7[%c0_26, %c0_27] : memref<1x128xf32, #tpu.memory_space<vmem>>, vector<1x128xf32>
      %cst_28 = arith.constant 0.000000e+00 : f32
      %54 = vector.broadcast %cst_28 : f32 to vector<128x128xf32>
      %55 = arith.select %43, %26, %54 : vector<128x128xi1>, vector<128x128xf32>
      %cst_29 = arith.constant dense<0.000000e+00> : vector<128xf32>
      %56 = vector.multi_reduction <add>, %55, %cst_29 [0] : vector<128x128xf32> to vector<128xf32>
      %57 = vector.shape_cast %56 : vector<128xf32> to vector<1x128xf32>
      %58 = arith.addf %53, %57 : vector<1x128xf32>
      %c0_30 = arith.constant 0 : index
      %c0_31 = arith.constant 0 : index
      %59 = vector.load %arg7[%c0_30, %c0_31] : memref<1x128xf32, #tpu.memory_space<vmem>>, vector<1x128xf32>
      tpu.vector_store %arg7[%c0_30, %c0_31], %58 {strides = array<i32>} : memref<1x128xf32, #tpu.memory_space<vmem>>, vector<1x128xf32>,
      %c0_32 = arith.constant 0 : index
      %c0_33 = arith.constant 0 : index
      %60 = vector.load %arg8[%c0_32, %c0_33] : memref<1x128xf32, #tpu.memory_space<vmem>>, vector<1x128xf32>
      %61 = arith.extui %43 : vector<128x128xi1> to vector<128x128xi32>
      %62 = arith.sitofp %61 : vector<128x128xi32> to vector<128x128xf32>
      %cst_34 = arith.constant dense<0.000000e+00> : vector<128xf32>
      %63 = vector.multi_reduction <add>, %62, %cst_34 [0] : vector<128x128xf32> to vector<128xf32>
      %64 = vector.shape_cast %63 : vector<128xf32> to vector<1x128xf32>
      %65 = arith.addf %60, %64 : vector<1x128xf32>
      %c0_35 = arith.constant 0 : index
      %c0_36 = arith.constant 0 : index
      %66 = vector.load %arg8[%c0_35, %c0_36] : memref<1x128xf32, #tpu.memory_space<vmem>>, vector<1x128xf32>
      tpu.vector_store %arg8[%c0_35, %c0_36], %65 {strides = array<i32>} : memref<1x128xf32, #tpu.memory_space<vmem>>, vector<1x128xf32>,
    } else {
    }
    %c0_i32_24 = arith.constant 0 : i32
    %50 = arith.cmpi eq, %arg1, %c0_i32_24 : i32
    %51 = arith.extui %50 : i1 to i32
    %c0_i32_25 = arith.constant 0 : i32
    %52 = arith.cmpi ne, %51, %c0_i32_25 : i32
    scf.if %52 {
      %c0_26 = arith.constant 0 : index
      %c0_27 = arith.constant 0 : index
      %53 = vector.load %arg7[%c0_26, %c0_27] : memref<1x128xf32, #tpu.memory_space<vmem>>, vector<1x128xf32>
      %c0_28 = arith.constant 0 : index
      %c0_29 = arith.constant 0 : index
      %c0_30 = arith.constant 0 : index
      %54 = vector.load %arg6[%c0_28, %c0_29, %c0_30] : memref<1x4x128xf32, #tpu.memory_space<vmem>>, vector<1x1x128xf32>
      %55 = vector.shape_cast %54 : vector<1x1x128xf32> to vector<1x128xf32>
      %56 = vector.shape_cast %53 : vector<1x128xf32> to vector<1x1x128xf32>
      tpu.vector_store %arg6[%c0_28, %c0_29, %c0_30], %56 {strides = array<i32>} : memref<1x4x128xf32, #tpu.memory_space<vmem>>, vector<1x1x128xf32>,
      %c0_31 = arith.constant 0 : index
      %c0_32 = arith.constant 0 : index
      %57 = vector.load %arg8[%c0_31, %c0_32] : memref<1x128xf32, #tpu.memory_space<vmem>>, vector<1x128xf32>
      %c0_33 = arith.constant 0 : index
      %c1 = arith.constant 1 : index
      %c0_34 = arith.constant 0 : index
      %58 = vector.load %arg6[%c0_33, %c1, %c0_34] : memref<1x4x128xf32, #tpu.memory_space<vmem>>, vector<1x1x128xf32>
      %59 = vector.shape_cast %58 : vector<1x1x128xf32> to vector<1x128xf32>
      %60 = vector.shape_cast %57 : vector<1x128xf32> to vector<1x1x128xf32>
      tpu.vector_store %arg6[%c0_33, %c1, %c0_34], %60 {strides = array<i32>} : memref<1x4x128xf32, #tpu.memory_space<vmem>>, vector<1x1x128xf32>,
      %c0_35 = arith.constant 0 : index
      %c0_36 = arith.constant 0 : index
      %61 = vector.load %arg9[%c0_35, %c0_36] : memref<1x128xf32, #tpu.memory_space<vmem>>, vector<1x128xf32>
      %c0_37 = arith.constant 0 : index
      %c2 = arith.constant 2 : index
      %c0_38 = arith.constant 0 : index
      %62 = vector.load %arg6[%c0_37, %c2, %c0_38] : memref<1x4x128xf32, #tpu.memory_space<vmem>>, vector<1x1x128xf32>
      %63 = vector.shape_cast %62 : vector<1x1x128xf32> to vector<1x128xf32>
      %64 = vector.shape_cast %61 : vector<1x128xf32> to vector<1x1x128xf32>
      tpu.vector_store %arg6[%c0_37, %c2, %c0_38], %64 {strides = array<i32>} : memref<1x4x128xf32, #tpu.memory_space<vmem>>, vector<1x1x128xf32>,
      %c0_39 = arith.constant 0 : index
      %c0_40 = arith.constant 0 : index
      %65 = vector.load %arg10[%c0_39, %c0_40] : memref<1x128xf32, #tpu.memory_space<vmem>>, vector<1x128xf32>
      %c0_41 = arith.constant 0 : index
      %c3 = arith.constant 3 : index
      %c0_42 = arith.constant 0 : index
      %66 = vector.load %arg6[%c0_41, %c3, %c0_42] : memref<1x4x128xf32, #tpu.memory_space<vmem>>, vector<1x1x128xf32>
      %67 = vector.shape_cast %66 : vector<1x1x128xf32> to vector<1x128xf32>
      %68 = vector.shape_cast %65 : vector<1x128xf32> to vector<1x1x128xf32>
      tpu.vector_store %arg6[%c0_41, %c3, %c0_42], %68 {strides = array<i32>} : memref<1x4x128xf32, #tpu.memory_space<vmem>>, vector<1x1x128xf32>,
    } else {
    }
    return
  }
  func.func @transform_0(%arg0: i32, %arg1: i32) -> (i32, i32) {
    %c0_i32 = arith.constant 0 : i32
    %c0_i32_0 = arith.constant 0 : i32
    return %arg0, %c0_i32 : i32, i32
  }
  func.func @transform_1(%arg0: i32, %arg1: i32) -> (i32, i32) {
    %c0_i32 = arith.constant 0 : i32
    %c0_i32_0 = arith.constant 0 : i32
    return %arg1, %c0_i32 : i32, i32
  }
  func.func @transform_2(%arg0: i32, %arg1: i32) -> (i32, i32) {
    %c0_i32 = arith.constant 0 : i32
    %c0_i32_0 = arith.constant 0 : i32
    return %arg0, %c0_i32 : i32, i32
  }
  func.func @transform_3(%arg0: i32, %arg1: i32) -> (i32, i32) {
    %c0_i32 = arith.constant 0 : i32
    %c0_i32_0 = arith.constant 0 : i32
    return %c0_i32, %arg1 : i32, i32
  }
  func.func @transform_4(%arg0: i32, %arg1: i32) -> (i32, i32, i32) {
    %c0_i32 = arith.constant 0 : i32
    %c0_i32_0 = arith.constant 0 : i32
    %c0_i32_1 = arith.constant 0 : i32
    return %arg0, %c0_i32, %c0_i32_0 : i32, i32, i32
  }
}

</mosaic_0001>

<llo_original>
// kernel: tpu_custom_call.1
$region0: #{tpu_custom_call.1}
  #allocation0 [shape = 'u32[]', space=smem, size = 0x4, offset = 0x4, fixed_abs, tag = 'smem constant byte address 0x4 - core index']
  #allocation1 [shape = 'u32[72,128]{1,0:T(1,128)}', space=vmem, size = 0x9000, scoped, tag = 'internal scratch']
  #allocation2 [shape = 'f32[1,128]{1,0:T(1,128)}', space=vmem, size = 0x200, scoped, tag = 'scratch operand']
  #allocation3 [shape = 'f32[1,128]{1,0:T(1,128)}', space=vmem, size = 0x200, scoped, tag = 'scratch operand']
  #allocation4 [shape = 'f32[1,128]{1,0:T(1,128)}', space=vmem, size = 0x200, scoped, tag = 'scratch operand']
  #allocation5 [shape = 'f32[1,128]{1,0:T(1,128)}', space=vmem, size = 0x200, scoped, tag = 'scratch operand']
  %s0 = inlined_call_operand.vmem [shape: f32[128,128], index: 0, kind: input, shape index: {}]
  %s1 = inlined_call_operand.hbm [shape: f32[128,128], index: 1, kind: input, shape index: {}]
  %s2 = inlined_call_operand.vmem [shape: s32[128,1], index: 2, kind: input, shape index: {}]
  %s3 = inlined_call_operand.vmem [shape: s32[1,128], index: 3, kind: input, shape index: {}]
  %s4 = inlined_call_operand.hbm [shape: f32[1,4,128], index: 4, kind: output, shape index: {}]
  %s5 = sld [smem:[#allocation0]]
  $region46: #{tpu_custom_call.1} parent=0
    _
  %s7 = ssub.s32 1, %s5
  %s8 = scalar_select 0, %s7, %s5
  $region1: #{tpu_custom_call.1} parent=0
    #allocation6 [shape = 'u8[65536]{0}', space=vmem, size = 0x10000, scoped, tag = 'input window, operand 1, single buffered']
    #allocation7 [shape = 's32[1]{0}', space=sflag, size = 0x4, scoped, tag = 'scoped memory for tpu_custom_call.1']
    #allocation8 [shape = 's32[1]{0}', space=sflag, size = 0x4, scoped, tag = 'scoped memory for tpu_custom_call.1']
    #allocation9 [shape = 'u8[2048]{0}', space=vmem, size = 0x800, scoped, tag = 'output window, operand 0, single buffered']
    %9 = vsyncpa [#allocation7], 0
    %10 = vsyncpa [#allocation8], 0
    // Predicated region
    $region2: #{tpu_custom_call.1} parent=1 // pred_check
      _
    $region3: #{tpu_custom_call.1} parent=1 // pred_check_branch
      %12 = sbr.rel (0) target = $region5
    $region4: #{tpu_custom_call.1} parent=1 // pred_region
      _
    $region5: #{tpu_custom_call.1} parent=1 // pred_fallthru
      _
    // Predicated region
    $region6: #{tpu_custom_call.1} parent=1 // pred_check
      _
    $region7: #{tpu_custom_call.1} parent=1 // pred_check_branch
      %14 = sbr.rel (0) target = $region9
    $region8: #{tpu_custom_call.1} parent=1 // pred_region
      %16 = vsyncadd [#allocation7], 0
      %s17 = sshll.u32 %s1, 4
      %s18 = int_to_ptr.hbm [resolvable:$true] %s17
      %s19 = sshll.u32 [#allocation6], 4
      %s20 = int_to_ptr.vmem [resolvable:$true] %s19
      %25 = dma.hbm_to_vmem [thread:$0]  %s18, 2048, %s20, [#allocation7], 128, 128, 8
    $region9: #{tpu_custom_call.1} parent=1 // pred_fallthru
      _
    // Predicated region
    $region10: #{tpu_custom_call.1} parent=1 // pred_check
      _
    $region11: #{tpu_custom_call.1} parent=1 // pred_check_branch
      %27 = sbr.rel (0) target = $region13
    $region12: #{tpu_custom_call.1} parent=1 // pred_region
      _
    $region13: #{tpu_custom_call.1} parent=1 // pred_fallthru
      _
    // Predicated region
    $region14: #{tpu_custom_call.1} parent=1 // pred_check
      _
    $region15: #{tpu_custom_call.1} parent=1 // pred_check_branch
      %29 = sbr.rel (0) target = $region17
    $region16: #{tpu_custom_call.1} parent=1 // pred_region
      _
    $region17: #{tpu_custom_call.1} parent=1 // pred_fallthru
      _
    // Predicated region
    $region18: #{tpu_custom_call.1} parent=1 // pred_check
      _
    $region19: #{tpu_custom_call.1} parent=1 // pred_check_branch
      %31 = sbr.rel (0) target = $region21
    $region20: #{tpu_custom_call.1} parent=1 // pred_region
      %33 = dma.done [#allocation7], 2048
    $region21: #{tpu_custom_call.1} parent=1 // pred_fallthru
      _
    %p34 = scmp.eq.s32.totalorder 0, 0
    // Predicated region
    $region22: #{tpu_custom_call.1} parent=1 // pred_check
      %p35 = pneg %p34
    $region23: #{tpu_custom_call.1} parent=1 // pred_check_branch
      %37 = sbr.rel (%p35) target = $region25
    $region24: #{tpu_custom_call.1} parent=1 // pred_region
      %38 = vst [vmem:[#allocation2] sm:$0x1] 0.0
      %39 = vst [vmem:[#allocation3] sm:$0x1] 0.0
      %40 = vst [vmem:[#allocation4] sm:$0x1] 0.0
      %41 = vst [vmem:[#allocation5] sm:$0x1] 0.0
    $region25: #{tpu_custom_call.1} parent=1 // pred_fallthru
      _
    %v42 = vld [vmem:[%s0] sm:$0xff]
    %v43 = vld [vmem:[%s0 + $0x8] sm:$0xff]
    %v44 = vld [vmem:[%s0 + $0x10] sm:$0xff]
    %v45 = vld [vmem:[%s0 + $0x18] sm:$0xff]
    %v46 = vld [vmem:[%s0 + $0x20] sm:$0xff]
    %v47 = vld [vmem:[%s0 + $0x28] sm:$0xff]
    %v48 = vld [vmem:[%s0 + $0x30] sm:$0xff]
    %v49 = vld [vmem:[%s0 + $0x38] sm:$0xff]
    %v50 = vld [vmem:[%s0 + $0x40] sm:$0xff]
    %v51 = vld [vmem:[%s0 + $0x48] sm:$0xff]
    %v52 = vld [vmem:[%s0 + $0x50] sm:$0xff]
    %v53 = vld [vmem:[%s0 + $0x58] sm:$0xff]
    %v54 = vld [vmem:[%s0 + $0x60] sm:$0xff]
    %v55 = vld [vmem:[%s0 + $0x68] sm:$0xff]
    %v56 = vld [vmem:[%s0 + $0x70] sm:$0xff]
    %v57 = vld [vmem:[%s0 + $0x78] sm:$0xff]
    %v58 = vld [vmem:[#allocation6] sm:$0xff]
    %v59 = vld [vmem:[#allocation6 + $0x8] sm:$0xff]
    %v60 = vld [vmem:[#allocation6 + $0x10] sm:$0xff]
    %v61 = vld [vmem:[#allocation6 + $0x18] sm:$0xff]
    %v62 = vld [vmem:[#allocation6 + $0x20] sm:$0xff]
    %v63 = vld [vmem:[#allocation6 + $0x28] sm:$0xff]
    %v64 = vld [vmem:[#allocation6 + $0x30] sm:$0xff]
    %v65 = vld [vmem:[#allocation6 + $0x38] sm:$0xff]
    %v66 = vld [vmem:[#allocation6 + $0x40] sm:$0xff]
    %v67 = vld [vmem:[#allocation6 + $0x48] sm:$0xff]
    %v68 = vld [vmem:[#allocation6 + $0x50] sm:$0xff]
    %v69 = vld [vmem:[#allocation6 + $0x58] sm:$0xff]
    %v70 = vld [vmem:[#allocation6 + $0x60] sm:$0xff]
    %v71 = vld [vmem:[#allocation6 + $0x68] sm:$0xff]
    %v72 = vld [vmem:[#allocation6 + $0x70] sm:$0xff]
    %v73 = vld [vmem:[#allocation6 + $0x78] sm:$0xff]
    %74 = vmatpush.xpose.msra.mxu0 %v73
    %75 = vmatpush.xpose.msra.mxu0 %v72
    %76 = vmatpush.xpose.msra.mxu0 %v71
    %77 = vmatpush.xpose.msra.mxu0 %v70
    %78 = vmatpush.xpose.msra.mxu0 %v69
    %79 = vmatpush.xpose.msra.mxu0 %v68
    %80 = vmatpush.xpose.msra.mxu0 %v67
    %81 = vmatpush.xpose.msra.mxu0 %v66
    %82 = vmatpush.xpose.msra.mxu0 %v65
    %83 = vmatpush.xpose.msra.mxu0 %v64
    %84 = vmatpush.xpose.msra.mxu0 %v63
    %85 = vmatpush.xpose.msra.mxu0 %v62
    %86 = vmatpush.xpose.msra.mxu0 %v61
    %87 = vmatpush.xpose.msra.mxu0 %v60
    %88 = vmatpush.xpose.msra.mxu0 %v59
    %89 = vmatpush.xpose.msra.mxu0 %v58
    %90 = vmatmul.f32.gmra.mxu0 %v42
    %v91 = vpop.f32.mrf.mxu0
    %v92 = vadd.f32 0.0, %v91
    %93 = vmatmul.f32.gmra.mxu0 %v43
    %v94 = vpop.f32.mrf.mxu0
    %v95 = vadd.f32 0.0, %v94
    %96 = vmatmul.f32.gmra.mxu0 %v44
    %v97 = vpop.f32.mrf.mxu0
    %v98 = vadd.f32 0.0, %v97
    %99 = vmatmul.f32.gmra.mxu0 %v45
    %v100 = vpop.f32.mrf.mxu0
    %v101 = vadd.f32 0.0, %v100
    %102 = vmatmul.f32.gmra.mxu0 %v46
    %v103 = vpop.f32.mrf.mxu0
    %v104 = vadd.f32 0.0, %v103
    %105 = vmatmul.f32.gmra.mxu0 %v47
    %v106 = vpop.f32.mrf.mxu0
    %v107 = vadd.f32 0.0, %v106
    %108 = vmatmul.f32.gmra.mxu0 %v48
    %v109 = vpop.f32.mrf.mxu0
    %v110 = vadd.f32 0.0, %v109
    %111 = vmatmul.f32.gmra.mxu0 %v49
    %v112 = vpop.f32.mrf.mxu0
    %v113 = vadd.f32 0.0, %v112
    %114 = vmatmul.f32.gmra.mxu0 %v50
    %v115 = vpop.f32.mrf.mxu0
    %v116 = vadd.f32 0.0, %v115
    %117 = vmatmul.f32.gmra.mxu0 %v51
    %v118 = vpop.f32.mrf.mxu0
    %v119 = vadd.f32 0.0, %v118
    %120 = vmatmul.f32.gmra.mxu0 %v52
    %v121 = vpop.f32.mrf.mxu0
    %v122 = vadd.f32 0.0, %v121
    %123 = vmatmul.f32.gmra.mxu0 %v53
    %v124 = vpop.f32.mrf.mxu0
    %v125 = vadd.f32 0.0, %v124
    %126 = vmatmul.f32.gmra.mxu0 %v54
    %v127 = vpop.f32.mrf.mxu0
    %v128 = vadd.f32 0.0, %v127
    %129 = vmatmul.f32.gmra.mxu0 %v55
    %v130 = vpop.f32.mrf.mxu0
    %v131 = vadd.f32 0.0, %v130
    %132 = vmatmul.f32.gmra.mxu0 %v56
    %v133 = vpop.f32.mrf.mxu0
    %v134 = vadd.f32 0.0, %v133
    %135 = vmatmul.f32.gmra.mxu0 %v57
    %v136 = vpop.f32.mrf.mxu0
    %v137 = vadd.f32 0.0, %v136
    %138 = vdwg.mxu0
    %v139 = vld [vmem:[%s2] sm:$0xff]
    %v140 = vld [vmem:[%s2 + $0x8] sm:$0xff]
    %v141 = vld [vmem:[%s2 + $0x10] sm:$0xff]
    %v142 = vld [vmem:[%s2 + $0x18] sm:$0xff]
    %v143 = vld [vmem:[%s2 + $0x20] sm:$0xff]
    %v144 = vld [vmem:[%s2 + $0x28] sm:$0xff]
    %v145 = vld [vmem:[%s2 + $0x30] sm:$0xff]
    %v146 = vld [vmem:[%s2 + $0x38] sm:$0xff]
    %v147 = vld [vmem:[%s2 + $0x40] sm:$0xff]
    %v148 = vld [vmem:[%s2 + $0x48] sm:$0xff]
    %v149 = vld [vmem:[%s2 + $0x50] sm:$0xff]
    %v150 = vld [vmem:[%s2 + $0x58] sm:$0xff]
    %v151 = vld [vmem:[%s2 + $0x60] sm:$0xff]
    %v152 = vld [vmem:[%s2 + $0x68] sm:$0xff]
    %v153 = vld [vmem:[%s2 + $0x70] sm:$0xff]
    %v154 = vld [vmem:[%s2 + $0x78] sm:$0xff]
    %v155 = vld [vmem:[%s3] sm:$0x1]
    %156 = vset.pattern.permute.xlu0 0
    %157 = vperm.xlu0 %156, %v139
    %v158 = vpop.permute.xlu0 %157
    %159 = vset.pattern.permute.xlu0 0
    %160 = vperm.xlu0 %159, %v140
    %v161 = vpop.permute.xlu0 %160
    %162 = vset.pattern.permute.xlu0 0
    %163 = vperm.xlu0 %162, %v141
    %v164 = vpop.permute.xlu0 %163
    %165 = vset.pattern.permute.xlu0 0
    %166 = vperm.xlu0 %165, %v142
    %v167 = vpop.permute.xlu0 %166
    %168 = vset.pattern.permute.xlu0 0
    %169 = vperm.xlu0 %168, %v143
    %v170 = vpop.permute.xlu0 %169
    %171 = vset.pattern.permute.xlu0 0
    %172 = vperm.xlu0 %171, %v144
    %v173 = vpop.permute.xlu0 %172
    %174 = vset.pattern.permute.xlu0 0
    %175 = vperm.xlu0 %174, %v145
    %v176 = vpop.permute.xlu0 %175
    %177 = vset.pattern.permute.xlu0 0
    %178 = vperm.xlu0 %177, %v146
    %v179 = vpop.permute.xlu0 %178
    %180 = vset.pattern.permute.xlu0 0
    %181 = vperm.xlu0 %180, %v147
    %v182 = vpop.permute.xlu0 %181
    %183 = vset.pattern.permute.xlu0 0
    %184 = vperm.xlu0 %183, %v148
    %v185 = vpop.permute.xlu0 %184
    %186 = vset.pattern.permute.xlu0 0
    %187 = vperm.xlu0 %186, %v149
    %v188 = vpop.permute.xlu0 %187
    %189 = vset.pattern.permute.xlu0 0
    %190 = vperm.xlu0 %189, %v150
    %v191 = vpop.permute.xlu0 %190
    %192 = vset.pattern.permute.xlu0 0
    %193 = vperm.xlu0 %192, %v151
    %v194 = vpop.permute.xlu0 %193
    %195 = vset.pattern.permute.xlu0 0
    %196 = vperm.xlu0 %195, %v152
    %v197 = vpop.permute.xlu0 %196
    %198 = vset.pattern.permute.xlu0 0
    %199 = vperm.xlu0 %198, %v153
    %v200 = vpop.permute.xlu0 %199
    %201 = vset.pattern.permute.xlu0 0
    %202 = vperm.xlu0 %201, %v154
    %v203 = vpop.permute.xlu0 %202
    %v204 = vperm.slane %v155, 0
    %vm205 = vcmp.eq.s32.totalorder %v158, %v204
    %vm206 = vcmp.eq.s32.totalorder %v161, %v204
    %vm207 = vcmp.eq.s32.totalorder %v164, %v204
    %vm208 = vcmp.eq.s32.totalorder %v167, %v204
    %vm209 = vcmp.eq.s32.totalorder %v170, %v204
    %vm210 = vcmp.eq.s32.totalorder %v173, %v204
    %vm211 = vcmp.eq.s32.totalorder %v176, %v204
    %vm212 = vcmp.eq.s32.totalorder %v179, %v204
    %vm213 = vcmp.eq.s32.totalorder %v182, %v204
    %vm214 = vcmp.eq.s32.totalorder %v185, %v204
    %vm215 = vcmp.eq.s32.totalorder %v188, %v204
    %vm216 = vcmp.eq.s32.totalorder %v191, %v204
    %vm217 = vcmp.eq.s32.totalorder %v194, %v204
    %vm218 = vcmp.eq.s32.totalorder %v197, %v204
    %vm219 = vcmp.eq.s32.totalorder %v200, %v204
    %vm220 = vcmp.eq.s32.totalorder %v203, %v204
    %vm221 = vcmp.ne.s32.totalorder %v139, 141
    %vm222 = vcmp.ne.s32.totalorder %v140, 141
    %vm223 = vcmp.ne.s32.totalorder %v141, 141
    %vm224 = vcmp.ne.s32.totalorder %v142, 141
    %vm225 = vcmp.ne.s32.totalorder %v143, 141
    %vm226 = vcmp.ne.s32.totalorder %v144, 141
    %vm227 = vcmp.ne.s32.totalorder %v145, 141
    %vm228 = vcmp.ne.s32.totalorder %v146, 141
    %vm229 = vcmp.ne.s32.totalorder %v147, 141
    %vm230 = vcmp.ne.s32.totalorder %v148, 141
    %vm231 = vcmp.ne.s32.totalorder %v149, 141
    %vm232 = vcmp.ne.s32.totalorder %v150, 141
    %vm233 = vcmp.ne.s32.totalorder %v151, 141
    %vm234 = vcmp.ne.s32.totalorder %v152, 141
    %vm235 = vcmp.ne.s32.totalorder %v153, 141
    %vm236 = vcmp.ne.s32.totalorder %v154, 141
    %v237 = vsel %vm221, 1, 0
    %v238 = vsel %vm222, 1, 0
    %v239 = vsel %vm223, 1, 0
    %v240 = vsel %vm224, 1, 0
    %v241 = vsel %vm225, 1, 0
    %v242 = vsel %vm226, 1, 0
    %v243 = vsel %vm227, 1, 0
    %v244 = vsel %vm228, 1, 0
    %v245 = vsel %vm229, 1, 0
    %v246 = vsel %vm230, 1, 0
    %v247 = vsel %vm231, 1, 0
    %v248 = vsel %vm232, 1, 0
    %v249 = vsel %vm233, 1, 0
    %v250 = vsel %vm234, 1, 0
    %v251 = vsel %vm235, 1, 0
    %v252 = vsel %vm236, 1, 0
    %253 = vset.pattern.permute.xlu0 0
    %254 = vperm.xlu0 %253, %v237
    %v255 = vpop.permute.xlu0 %254
    %256 = vset.pattern.permute.xlu0 0
    %257 = vperm.xlu0 %256, %v238
    %v258 = vpop.permute.xlu0 %257
    %259 = vset.pattern.permute.xlu0 0
    %260 = vperm.xlu0 %259, %v239
    %v261 = vpop.permute.xlu0 %260
    %262 = vset.pattern.permute.xlu0 0
    %263 = vperm.xlu0 %262, %v240
    %v264 = vpop.permute.xlu0 %263
    %265 = vset.pattern.permute.xlu0 0
    %266 = vperm.xlu0 %265, %v241
    %v267 = vpop.permute.xlu0 %266
    %268 = vset.pattern.permute.xlu0 0
    %269 = vperm.xlu0 %268, %v242
    %v270 = vpop.permute.xlu0 %269
    %271 = vset.pattern.permute.xlu0 0
    %272 = vperm.xlu0 %271, %v243
    %v273 = vpop.permute.xlu0 %272
    %274 = vset.pattern.permute.xlu0 0
    %275 = vperm.xlu0 %274, %v244
    %v276 = vpop.permute.xlu0 %275
    %277 = vset.pattern.permute.xlu0 0
    %278 = vperm.xlu0 %277, %v245
    %v279 = vpop.permute.xlu0 %278
    %280 = vset.pattern.permute.xlu0 0
    %281 = vperm.xlu0 %280, %v246
    %v282 = vpop.permute.xlu0 %281
    %283 = vset.pattern.permute.xlu0 0
    %284 = vperm.xlu0 %283, %v247
    %v285 = vpop.permute.xlu0 %284
    %286 = vset.pattern.permute.xlu0 0
    %287 = vperm.xlu0 %286, %v248
    %v288 = vpop.permute.xlu0 %287
    %289 = vset.pattern.permute.xlu0 0
    %290 = vperm.xlu0 %289, %v249
    %v291 = vpop.permute.xlu0 %290
    %292 = vset.pattern.permute.xlu0 0
    %293 = vperm.xlu0 %292, %v250
    %v294 = vpop.permute.xlu0 %293
    %295 = vset.pattern.permute.xlu0 0
    %296 = vperm.xlu0 %295, %v251
    %v297 = vpop.permute.xlu0 %296
    %298 = vset.pattern.permute.xlu0 0
    %299 = vperm.xlu0 %298, %v252
    %v300 = vpop.permute.xlu0 %299
    %vm301 = vcmp.eq.s32.totalorder %v255, 1
    %vm302 = vcmp.eq.s32.totalorder %v258, 1
    %vm303 = vcmp.eq.s32.totalorder %v261, 1
    %vm304 = vcmp.eq.s32.totalorder %v264, 1
    %vm305 = vcmp.eq.s32.totalorder %v267, 1
    %vm306 = vcmp.eq.s32.totalorder %v270, 1
    %vm307 = vcmp.eq.s32.totalorder %v273, 1
    %vm308 = vcmp.eq.s32.totalorder %v276, 1
    %vm309 = vcmp.eq.s32.totalorder %v279, 1
    %vm310 = vcmp.eq.s32.totalorder %v282, 1
    %vm311 = vcmp.eq.s32.totalorder %v285, 1
    %vm312 = vcmp.eq.s32.totalorder %v288, 1
    %vm313 = vcmp.eq.s32.totalorder %v291, 1
    %vm314 = vcmp.eq.s32.totalorder %v294, 1
    %vm315 = vcmp.eq.s32.totalorder %v297, 1
    %vm316 = vcmp.eq.s32.totalorder %v300, 1
    %vm317 = vmand %vm205, %vm301
    %vm318 = vmand %vm206, %vm302
    %vm319 = vmand %vm207, %vm303
    %vm320 = vmand %vm208, %vm304
    %vm321 = vmand %vm209, %vm305
    %vm322 = vmand %vm210, %vm306
    %vm323 = vmand %vm211, %vm307
    %vm324 = vmand %vm212, %vm308
    %vm325 = vmand %vm213, %vm309
    %vm326 = vmand %vm214, %vm310
    %vm327 = vmand %vm215, %vm311
    %vm328 = vmand %vm216, %vm312
    %vm329 = vmand %vm217, %vm313
    %vm330 = vmand %vm218, %vm314
    %vm331 = vmand %vm219, %vm315
    %vm332 = vmand %vm220, %vm316
    %vm333 = vcmp.gt.f32.partialorder %v92, 0.0
    %vm334 = vcmp.gt.f32.partialorder %v95, 0.0
    %vm335 = vcmp.gt.f32.partialorder %v98, 0.0
    %vm336 = vcmp.gt.f32.partialorder %v101, 0.0
    %vm337 = vcmp.gt.f32.partialorder %v104, 0.0
    %vm338 = vcmp.gt.f32.partialorder %v107, 0.0
    %vm339 = vcmp.gt.f32.partialorder %v110, 0.0
    %vm340 = vcmp.gt.f32.partialorder %v113, 0.0
    %vm341 = vcmp.gt.f32.partialorder %v116, 0.0
    %vm342 = vcmp.gt.f32.partialorder %v119, 0.0
    %vm343 = vcmp.gt.f32.partialorder %v122, 0.0
    %vm344 = vcmp.gt.f32.partialorder %v125, 0.0
    %vm345 = vcmp.gt.f32.partialorder %v128, 0.0
    %vm346 = vcmp.gt.f32.partialorder %v131, 0.0
    %vm347 = vcmp.gt.f32.partialorder %v134, 0.0
    %vm348 = vcmp.gt.f32.partialorder %v137, 0.0
    %v349 = vsub.f32 %v92, 0.5
    %v350 = vsub.f32 %v95, 0.5
    %v351 = vsub.f32 %v98, 0.5
    %v352 = vsub.f32 %v101, 0.5
    %v353 = vsub.f32 %v104, 0.5
    %v354 = vsub.f32 %v107, 0.5
    %v355 = vsub.f32 %v110, 0.5
    %v356 = vsub.f32 %v113, 0.5
    %v357 = vsub.f32 %v116, 0.5
    %v358 = vsub.f32 %v119, 0.5
    %v359 = vsub.f32 %v122, 0.5
    %v360 = vsub.f32 %v125, 0.5
    %v361 = vsub.f32 %v128, 0.5
    %v362 = vsub.f32 %v131, 0.5
    %v363 = vsub.f32 %v134, 0.5
    %v364 = vsub.f32 %v137, 0.5
    %v365 = vmul.f32 %v349, 1.442695
    %v366 = vpow.pop %v365
    %v367 = vmul.f32 %v350, 1.442695
    %v368 = vpow.pop %v367
    %v369 = vmul.f32 %v351, 1.442695
    %v370 = vpow.pop %v369
    %v371 = vmul.f32 %v352, 1.442695
    %v372 = vpow.pop %v371
    %v373 = vmul.f32 %v353, 1.442695
    %v374 = vpow.pop %v373
    %v375 = vmul.f32 %v354, 1.442695
    %v376 = vpow.pop %v375
    %v377 = vmul.f32 %v355, 1.442695
    %v378 = vpow.pop %v377
    %v379 = vmul.f32 %v356, 1.442695
    %v380 = vpow.pop %v379
    %v381 = vmul.f32 %v357, 1.442695
    %v382 = vpow.pop %v381
    %v383 = vmul.f32 %v358, 1.442695
    %v384 = vpow.pop %v383
    %v385 = vmul.f32 %v359, 1.442695
    %v386 = vpow.pop %v385
    %v387 = vmul.f32 %v360, 1.442695
    %v388 = vpow.pop %v387
    %v389 = vmul.f32 %v361, 1.442695
    %v390 = vpow.pop %v389
    %v391 = vmul.f32 %v362, 1.442695
    %v392 = vpow.pop %v391
    %v393 = vmul.f32 %v363, 1.442695
    %v394 = vpow.pop %v393
    %v395 = vmul.f32 %v364, 1.442695
    %v396 = vpow.pop %v395
    %v397 = vmul.f32 %v366, %v366
    %v398 = vmul.f32 %v368, %v368
    %v399 = vmul.f32 %v370, %v370
    %v400 = vmul.f32 %v372, %v372
    %v401 = vmul.f32 %v374, %v374
    %v402 = vmul.f32 %v376, %v376
    %v403 = vmul.f32 %v378, %v378
    %v404 = vmul.f32 %v380, %v380
    %v405 = vmul.f32 %v382, %v382
    %v406 = vmul.f32 %v384, %v384
    %v407 = vmul.f32 %v386, %v386
    %v408 = vmul.f32 %v388, %v388
    %v409 = vmul.f32 %v390, %v390
    %v410 = vmul.f32 %v392, %v392
    %v411 = vmul.f32 %v394, %v394
    %v412 = vmul.f32 %v396, %v396
    %v413 = vmul.f32 %v397, %v397
    %v414 = vmul.f32 %v398, %v398
    %v415 = vmul.f32 %v399, %v399
    %v416 = vmul.f32 %v400, %v400
    %v417 = vmul.f32 %v401, %v401
    %v418 = vmul.f32 %v402, %v402
    %v419 = vmul.f32 %v403, %v403
    %v420 = vmul.f32 %v404, %v404
    %v421 = vmul.f32 %v405, %v405
    %v422 = vmul.f32 %v406, %v406
    %v423 = vmul.f32 %v407, %v407
    %v424 = vmul.f32 %v408, %v408
    %v425 = vmul.f32 %v409, %v409
    %v426 = vmul.f32 %v410, %v410
    %v427 = vmul.f32 %v411, %v411
    %v428 = vmul.f32 %v412, %v412
    %v429 = vmul.f32 %v413, %v413
    %v430 = vmul.f32 %v414, %v414
    %v431 = vmul.f32 %v415, %v415
    %v432 = vmul.f32 %v416, %v416
    %v433 = vmul.f32 %v417, %v417
    %v434 = vmul.f32 %v418, %v418
    %v435 = vmul.f32 %v419, %v419
    %v436 = vmul.f32 %v420, %v420
    %v437 = vmul.f32 %v421, %v421
    %v438 = vmul.f32 %v422, %v422
    %v439 = vmul.f32 %v423, %v423
    %v440 = vmul.f32 %v424, %v424
    %v441 = vmul.f32 %v425, %v425
    %v442 = vmul.f32 %v426, %v426
    %v443 = vmul.f32 %v427, %v427
    %v444 = vmul.f32 %v428, %v428
    %v445 = vmul.f32 %v429, %v429
    %v446 = vmul.f32 %v430, %v430
    %v447 = vmul.f32 %v431, %v431
    %v448 = vmul.f32 %v432, %v432
    %v449 = vmul.f32 %v433, %v433
    %v450 = vmul.f32 %v434, %v434
    %v451 = vmul.f32 %v435, %v435
    %v452 = vmul.f32 %v436, %v436
    %v453 = vmul.f32 %v437, %v437
    %v454 = vmul.f32 %v438, %v438
    %v455 = vmul.f32 %v439, %v439
    %v456 = vmul.f32 %v440, %v440
    %v457 = vmul.f32 %v441, %v441
    %v458 = vmul.f32 %v442, %v442
    %v459 = vmul.f32 %v443, %v443
    %v460 = vmul.f32 %v444, %v444
    %v461 = vmul.f32 %v445, %v445
    %v462 = vmul.f32 %v446, %v446
    %v463 = vmul.f32 %v447, %v447
    %v464 = vmul.f32 %v448, %v448
    %v465 = vmul.f32 %v449, %v449
    %v466 = vmul.f32 %v450, %v450
    %v467 = vmul.f32 %v451, %v451
    %v468 = vmul.f32 %v452, %v452
    %v469 = vmul.f32 %v453, %v453
    %v470 = vmul.f32 %v454, %v454
    %v471 = vmul.f32 %v455, %v455
    %v472 = vmul.f32 %v456, %v456
    %v473 = vmul.f32 %v457, %v457
    %v474 = vmul.f32 %v458, %v458
    %v475 = vmul.f32 %v459, %v459
    %v476 = vmul.f32 %v460, %v460
    %v477 = vmul.f32 %v461, %v429
    %v478 = vmul.f32 %v462, %v430
    %v479 = vmul.f32 %v463, %v431
    %v480 = vmul.f32 %v464, %v432
    %v481 = vmul.f32 %v465, %v433
    %v482 = vmul.f32 %v466, %v434
    %v483 = vmul.f32 %v467, %v435
    %v484 = vmul.f32 %v468, %v436
    %v485 = vmul.f32 %v469, %v437
    %v486 = vmul.f32 %v470, %v438
    %v487 = vmul.f32 %v471, %v439
    %v488 = vmul.f32 %v472, %v440
    %v489 = vmul.f32 %v473, %v441
    %v490 = vmul.f32 %v474, %v442
    %v491 = vmul.f32 %v475, %v443
    %v492 = vmul.f32 %v476, %v444
    %v493 = vrcp.pop %v397
    %v494 = vrcp.pop %v398
    %v495 = vrcp.pop %v399
    %v496 = vrcp.pop %v400
    %v497 = vrcp.pop %v401
    %v498 = vrcp.pop %v402
    %v499 = vrcp.pop %v403
    %v500 = vrcp.pop %v404
    %v501 = vrcp.pop %v405
    %v502 = vrcp.pop %v406
    %v503 = vrcp.pop %v407
    %v504 = vrcp.pop %v408
    %v505 = vrcp.pop %v409
    %v506 = vrcp.pop %v410
    %v507 = vrcp.pop %v411
    %v508 = vrcp.pop %v412
    %vm509 = vmxor %vm317, 1
    %vm510 = vmxor %vm318, 1
    %vm511 = vmxor %vm319, 1
    %vm512 = vmxor %vm320, 1
    %vm513 = vmxor %vm321, 1
    %vm514 = vmxor %vm322, 1
    %vm515 = vmxor %vm323, 1
    %vm516 = vmxor %vm324, 1
    %vm517 = vmxor %vm325, 1
    %vm518 = vmxor %vm326, 1
    %vm519 = vmxor %vm327, 1
    %vm520 = vmxor %vm328, 1
    %vm521 = vmxor %vm329, 1
    %vm522 = vmxor %vm330, 1
    %vm523 = vmxor %vm331, 1
    %vm524 = vmxor %vm332, 1
    %vm525 = vmand %vm509, %vm333
    %vm526 = vmand %vm510, %vm334
    %vm527 = vmand %vm511, %vm335
    %vm528 = vmand %vm512, %vm336
    %vm529 = vmand %vm513, %vm337
    %vm530 = vmand %vm514, %vm338
    %vm531 = vmand %vm515, %vm339
    %vm532 = vmand %vm516, %vm340
    %vm533 = vmand %vm517, %vm341
    %vm534 = vmand %vm518, %vm342
    %vm535 = vmand %vm519, %vm343
    %vm536 = vmand %vm520, %vm344
    %vm537 = vmand %vm521, %vm345
    %vm538 = vmand %vm522, %vm346
    %vm539 = vmand %vm523, %vm347
    %vm540 = vmand %vm524, %vm348
    %v541 = vld [vmem:[#allocation4] sm:$0x1]
    %v542 = vsel %vm525, %v477, 0.0
    %v543 = vsel %vm526, %v478, 0.0
    %v544 = vsel %vm527, %v479, 0.0
    %v545 = vsel %vm528, %v480, 0.0
    %v546 = vsel %vm529, %v481, 0.0
    %v547 = vsel %vm530, %v482, 0.0
    %v548 = vsel %vm531, %v483, 0.0
    %v549 = vsel %vm532, %v484, 0.0
    %v550 = vsel %vm533, %v485, 0.0
    %v551 = vsel %vm534, %v486, 0.0
    %v552 = vsel %vm535, %v487, 0.0
    %v553 = vsel %vm536, %v488, 0.0
    %v554 = vsel %vm537, %v489, 0.0
    %v555 = vsel %vm538, %v490, 0.0
    %v556 = vsel %vm539, %v491, 0.0
    %v557 = vsel %vm540, %v492, 0.0
    %v558 = vadd.f32 %v542, %v543
    %v559 = vadd.f32 %v558, %v544
    %v560 = vadd.f32 %v559, %v545
    %v561 = vadd.f32 %v560, %v546
    %v562 = vadd.f32 %v561, %v547
    %v563 = vadd.f32 %v562, %v548
    %v564 = vadd.f32 %v563, %v549
    %v565 = vadd.f32 %v564, %v550
    %v566 = vadd.f32 %v565, %v551
    %v567 = vadd.f32 %v566, %v552
    %v568 = vadd.f32 %v567, %v553
    %v569 = vadd.f32 %v568, %v554
    %v570 = vadd.f32 %v569, %v555
    %v571 = vadd.f32 %v570, %v556
    %v572 = vadd.f32 %v571, %v557
    %v573 = vrot.slane %v572, 4
    %v574 = vadd.f32 %v572, %v573
    %v575 = vrot.slane %v574, 2
    %v576 = vadd.f32 %v574, %v575
    %v577 = vrot.slane %v576, 1
    %v578 = vadd.f32 %v576, %v577
    %v579 = vadd.f32 %v541, %v578
    %580 = vst [vmem:[#allocation4] sm:$0x1] %v579
    %v581 = vld [vmem:[#allocation5] sm:$0x1]
    %v582 = vsel %vm525, 1, 0
    %v583 = vsel %vm526, 1, 0
    %v584 = vsel %vm527, 1, 0
    %v585 = vsel %vm528, 1, 0
    %v586 = vsel %vm529, 1, 0
    %v587 = vsel %vm530, 1, 0
    %v588 = vsel %vm531, 1, 0
    %v589 = vsel %vm532, 1, 0
    %v590 = vsel %vm533, 1, 0
    %v591 = vsel %vm534, 1, 0
    %v592 = vsel %vm535, 1, 0
    %v593 = vsel %vm536, 1, 0
    %v594 = vsel %vm537, 1, 0
    %v595 = vsel %vm538, 1, 0
    %v596 = vsel %vm539, 1, 0
    %v597 = vsel %vm540, 1, 0
    %v598 = vcvt.s32.f32 %v582
    %v599 = vcvt.s32.f32 %v583
    %v600 = vcvt.s32.f32 %v584
    %v601 = vcvt.s32.f32 %v585
    %v602 = vcvt.s32.f32 %v586
    %v603 = vcvt.s32.f32 %v587
    %v604 = vcvt.s32.f32 %v588
    %v605 = vcvt.s32.f32 %v589
    %v606 = vcvt.s32.f32 %v590
    %v607 = vcvt.s32.f32 %v591
    %v608 = vcvt.s32.f32 %v592
    %v609 = vcvt.s32.f32 %v593
    %v610 = vcvt.s32.f32 %v594
    %v611 = vcvt.s32.f32 %v595
    %v612 = vcvt.s32.f32 %v596
    %v613 = vcvt.s32.f32 %v597
    %v614 = vadd.f32 %v598, %v599
    %v615 = vadd.f32 %v614, %v600
    %v616 = vadd.f32 %v615, %v601
    %v617 = vadd.f32 %v616, %v602
    %v618 = vadd.f32 %v617, %v603
    %v619 = vadd.f32 %v618, %v604
    %v620 = vadd.f32 %v619, %v605
    %v621 = vadd.f32 %v620, %v606
    %v622 = vadd.f32 %v621, %v607
    %v623 = vadd.f32 %v622, %v608
    %v624 = vadd.f32 %v623, %v609
    %v625 = vadd.f32 %v624, %v610
    %v626 = vadd.f32 %v625, %v611
    %v627 = vadd.f32 %v626, %v612
    %v628 = vadd.f32 %v627, %v613
    %v629 = vrot.slane %v628, 4
    %v630 = vadd.f32 %v628, %v629
    %v631 = vrot.slane %v630, 2
    %v632 = vadd.f32 %v630, %v631
    %v633 = vrot.slane %v632, 1
    %v634 = vadd.f32 %v632, %v633
    %v635 = vadd.f32 %v581, %v634
    %636 = vst [vmem:[#allocation5] sm:$0x1] %v635
    %vm637 = vmand %vm317, %vm333
    %vm638 = vmand %vm318, %vm334
    %vm639 = vmand %vm319, %vm335
    %vm640 = vmand %vm320, %vm336
    %vm641 = vmand %vm321, %vm337
    %vm642 = vmand %vm322, %vm338
    %vm643 = vmand %vm323, %vm339
    %vm644 = vmand %vm324, %vm340
    %vm645 = vmand %vm325, %vm341
    %vm646 = vmand %vm326, %vm342
    %vm647 = vmand %vm327, %vm343
    %vm648 = vmand %vm328, %vm344
    %vm649 = vmand %vm329, %vm345
    %vm650 = vmand %vm330, %vm346
    %vm651 = vmand %vm331, %vm347
    %vm652 = vmand %vm332, %vm348
    %p653 = scmp.eq.s32.totalorder 0, 0
    // Predicated region
    $region26: #{tpu_custom_call.1} parent=1 // pred_check
      %p654 = pneg %p653
    $region27: #{tpu_custom_call.1} parent=1 // pred_check_branch
      %656 = sbr.rel (%p654) target = $region29
    $region28: #{tpu_custom_call.1} parent=1 // pred_region
      %v657 = vlaneseq
      %v658 = vshrl.u32 %v657, 7
      %v659 = vadd.s32 %v658, 8
      %v660 = vadd.s32 %v658, 16
      %v661 = vadd.s32 %v658, 24
      %v662 = vadd.s32 %v658, 32
      %v663 = vadd.s32 %v658, 40
      %v664 = vadd.s32 %v658, 48
      %v665 = vadd.s32 %v658, 56
      %v666 = vadd.s32 %v658, 64
      %v667 = vadd.s32 %v658, 72
      %v668 = vadd.s32 %v658, 80
      %v669 = vadd.s32 %v658, 88
      %v670 = vadd.s32 %v658, 96
      %v671 = vadd.s32 %v658, 104
      %v672 = vadd.s32 %v658, 112
      %v673 = vadd.s32 %v658, 120
      %v674 = vlaneseq
      %v675 = vand.u32 %v674, 127
      %vm676 = vcmp.ne.s32.totalorder %v658, %v675
      %vm677 = vcmp.ne.s32.totalorder %v659, %v675
      %vm678 = vcmp.ne.s32.totalorder %v660, %v675
      %vm679 = vcmp.ne.s32.totalorder %v661, %v675
      %vm680 = vcmp.ne.s32.totalorder %v662, %v675
      %vm681 = vcmp.ne.s32.totalorder %v663, %v675
      %vm682 = vcmp.ne.s32.totalorder %v664, %v675
      %vm683 = vcmp.ne.s32.totalorder %v665, %v675
      %vm684 = vcmp.ne.s32.totalorder %v666, %v675
      %vm685 = vcmp.ne.s32.totalorder %v667, %v675
      %vm686 = vcmp.ne.s32.totalorder %v668, %v675
      %vm687 = vcmp.ne.s32.totalorder %v669, %v675
      %vm688 = vcmp.ne.s32.totalorder %v670, %v675
      %vm689 = vcmp.ne.s32.totalorder %v671, %v675
      %vm690 = vcmp.ne.s32.totalorder %v672, %v675
      %vm691 = vcmp.ne.s32.totalorder %v673, %v675
      %vm692 = vmand %vm637, %vm676
      %vm693 = vmand %vm638, %vm677
      %vm694 = vmand %vm639, %vm678
      %vm695 = vmand %vm640, %vm679
      %vm696 = vmand %vm641, %vm680
      %vm697 = vmand %vm642, %vm681
      %vm698 = vmand %vm643, %vm682
      %vm699 = vmand %vm644, %vm683
      %vm700 = vmand %vm645, %vm684
      %vm701 = vmand %vm646, %vm685
      %vm702 = vmand %vm647, %vm686
      %vm703 = vmand %vm648, %vm687
      %vm704 = vmand %vm649, %vm688
      %vm705 = vmand %vm650, %vm689
      %vm706 = vmand %vm651, %vm690
      %vm707 = vmand %vm652, %vm691
      %v708 = vld [vmem:[#allocation2] sm:$0x1]
      %v709 = vsel %vm692, %v493, 0.0
      %v710 = vsel %vm693, %v494, 0.0
      %v711 = vsel %vm694, %v495, 0.0
      %v712 = vsel %vm695, %v496, 0.0
      %v713 = vsel %vm696, %v497, 0.0
      %v714 = vsel %vm697, %v498, 0.0
      %v715 = vsel %vm698, %v499, 0.0
      %v716 = vsel %vm699, %v500, 0.0
      %v717 = vsel %vm700, %v501, 0.0
      %v718 = vsel %vm701, %v502, 0.0
      %v719 = vsel %vm702, %v503, 0.0
      %v720 = vsel %vm703, %v504, 0.0
      %v721 = vsel %vm704, %v505, 0.0
      %v722 = vsel %vm705, %v506, 0.0
      %v723 = vsel %vm706, %v507, 0.0
      %v724 = vsel %vm707, %v508, 0.0
      %v725 = vadd.f32 %v709, %v710
      %v726 = vadd.f32 %v725, %v711
      %v727 = vadd.f32 %v726, %v712
      %v728 = vadd.f32 %v727, %v713
      %v729 = vadd.f32 %v728, %v714
      %v730 = vadd.f32 %v729, %v715
      %v731 = vadd.f32 %v730, %v716
      %v732 = vadd.f32 %v731, %v717
      %v733 = vadd.f32 %v732, %v718
      %v734 = vadd.f32 %v733, %v719
      %v735 = vadd.f32 %v734, %v720
      %v736 = vadd.f32 %v735, %v721
      %v737 = vadd.f32 %v736, %v722
      %v738 = vadd.f32 %v737, %v723
      %v739 = vadd.f32 %v738, %v724
      %v740 = vrot.slane %v739, 4
      %v741 = vadd.f32 %v739, %v740
      %v742 = vrot.slane %v741, 2
      %v743 = vadd.f32 %v741, %v742
      %v744 = vrot.slane %v743, 1
      %v745 = vadd.f32 %v743, %v744
      %v746 = vadd.f32 %v708, %v745
      %747 = vst [vmem:[#allocation2] sm:$0x1] %v746
      %v748 = vld [vmem:[#allocation3] sm:$0x1]
      %v749 = vsel %vm692, 1, 0
      %v750 = vsel %vm693, 1, 0
      %v751 = vsel %vm694, 1, 0
      %v752 = vsel %vm695, 1, 0
      %v753 = vsel %vm696, 1, 0
      %v754 = vsel %vm697, 1, 0
      %v755 = vsel %vm698, 1, 0
      %v756 = vsel %vm699, 1, 0
      %v757 = vsel %vm700, 1, 0
      %v758 = vsel %vm701, 1, 0
      %v759 = vsel %vm702, 1, 0
      %v760 = vsel %vm703, 1, 0
      %v761 = vsel %vm704, 1, 0
      %v762 = vsel %vm705, 1, 0
      %v763 = vsel %vm706, 1, 0
      %v764 = vsel %vm707, 1, 0
      %v765 = vcvt.s32.f32 %v749
      %v766 = vcvt.s32.f32 %v750
      %v767 = vcvt.s32.f32 %v751
      %v768 = vcvt.s32.f32 %v752
      %v769 = vcvt.s32.f32 %v753
      %v770 = vcvt.s32.f32 %v754
      %v771 = vcvt.s32.f32 %v755
      %v772 = vcvt.s32.f32 %v756
      %v773 = vcvt.s32.f32 %v757
      %v774 = vcvt.s32.f32 %v758
      %v775 = vcvt.s32.f32 %v759
      %v776 = vcvt.s32.f32 %v760
      %v777 = vcvt.s32.f32 %v761
      %v778 = vcvt.s32.f32 %v762
      %v779 = vcvt.s32.f32 %v763
      %v780 = vcvt.s32.f32 %v764
      %v781 = vadd.f32 %v765, %v766
      %v782 = vadd.f32 %v781, %v767
      %v783 = vadd.f32 %v782, %v768
      %v784 = vadd.f32 %v783, %v769
      %v785 = vadd.f32 %v784, %v770
      %v786 = vadd.f32 %v785, %v771
      %v787 = vadd.f32 %v786, %v772
      %v788 = vadd.f32 %v787, %v773
      %v789 = vadd.f32 %v788, %v774
      %v790 = vadd.f32 %v789, %v775
      %v791 = vadd.f32 %v790, %v776
      %v792 = vadd.f32 %v791, %v777
      %v793 = vadd.f32 %v792, %v778
      %v794 = vadd.f32 %v793, %v779
      %v795 = vadd.f32 %v794, %v780
      %v796 = vrot.slane %v795, 4
      %v797 = vadd.f32 %v795, %v796
      %v798 = vrot.slane %v797, 2
      %v799 = vadd.f32 %v797, %v798
      %v800 = vrot.slane %v799, 1
      %v801 = vadd.f32 %v799, %v800
      %v802 = vadd.f32 %v748, %v801
      %803 = vst [vmem:[#allocation3] sm:$0x1] %v802
    $region29: #{tpu_custom_call.1} parent=1 // pred_fallthru
      _
    %p804 = scmp.ne.s32.totalorder 0, 0
    // Predicated region
    $region30: #{tpu_custom_call.1} parent=1 // pred_check
      %p805 = pneg %p804
    $region31: #{tpu_custom_call.1} parent=1 // pred_check_branch
      %807 = sbr.rel (%p805) target = $region33
    $region32: #{tpu_custom_call.1} parent=1 // pred_region
      %v808 = vld [vmem:[#allocation2] sm:$0x1]
      %v809 = vsel %vm637, %v493, 0.0
      %v810 = vsel %vm638, %v494, 0.0
      %v811 = vsel %vm639, %v495, 0.0
      %v812 = vsel %vm640, %v496, 0.0
      %v813 = vsel %vm641, %v497, 0.0
      %v814 = vsel %vm642, %v498, 0.0
      %v815 = vsel %vm643, %v499, 0.0
      %v816 = vsel %vm644, %v500, 0.0
      %v817 = vsel %vm645, %v501, 0.0
      %v818 = vsel %vm646, %v502, 0.0
      %v819 = vsel %vm647, %v503, 0.0
      %v820 = vsel %vm648, %v504, 0.0
      %v821 = vsel %vm649, %v505, 0.0
      %v822 = vsel %vm650, %v506, 0.0
      %v823 = vsel %vm651, %v507, 0.0
      %v824 = vsel %vm652, %v508, 0.0
      %v825 = vadd.f32 %v809, %v810
      %v826 = vadd.f32 %v825, %v811
      %v827 = vadd.f32 %v826, %v812
      %v828 = vadd.f32 %v827, %v813
      %v829 = vadd.f32 %v828, %v814
      %v830 = vadd.f32 %v829, %v815
      %v831 = vadd.f32 %v830, %v816
      %v832 = vadd.f32 %v831, %v817
      %v833 = vadd.f32 %v832, %v818
      %v834 = vadd.f32 %v833, %v819
      %v835 = vadd.f32 %v834, %v820
      %v836 = vadd.f32 %v835, %v821
      %v837 = vadd.f32 %v836, %v822
      %v838 = vadd.f32 %v837, %v823
      %v839 = vadd.f32 %v838, %v824
      %v840 = vrot.slane %v839, 4
      %v841 = vadd.f32 %v839, %v840
      %v842 = vrot.slane %v841, 2
      %v843 = vadd.f32 %v841, %v842
      %v844 = vrot.slane %v843, 1
      %v845 = vadd.f32 %v843, %v844
      %v846 = vadd.f32 %v808, %v845
      %847 = vst [vmem:[#allocation2] sm:$0x1] %v846
      %v848 = vld [vmem:[#allocation3] sm:$0x1]
      %v849 = vsel %vm637, 1, 0
      %v850 = vsel %vm638, 1, 0
      %v851 = vsel %vm639, 1, 0
      %v852 = vsel %vm640, 1, 0
      %v853 = vsel %vm641, 1, 0
      %v854 = vsel %vm642, 1, 0
      %v855 = vsel %vm643, 1, 0
      %v856 = vsel %vm644, 1, 0
      %v857 = vsel %vm645, 1, 0
      %v858 = vsel %vm646, 1, 0
      %v859 = vsel %vm647, 1, 0
      %v860 = vsel %vm648, 1, 0
      %v861 = vsel %vm649, 1, 0
      %v862 = vsel %vm650, 1, 0
      %v863 = vsel %vm651, 1, 0
      %v864 = vsel %vm652, 1, 0
      %v865 = vcvt.s32.f32 %v849
      %v866 = vcvt.s32.f32 %v850
      %v867 = vcvt.s32.f32 %v851
      %v868 = vcvt.s32.f32 %v852
      %v869 = vcvt.s32.f32 %v853
      %v870 = vcvt.s32.f32 %v854
      %v871 = vcvt.s32.f32 %v855
      %v872 = vcvt.s32.f32 %v856
      %v873 = vcvt.s32.f32 %v857
      %v874 = vcvt.s32.f32 %v858
      %v875 = vcvt.s32.f32 %v859
      %v876 = vcvt.s32.f32 %v860
      %v877 = vcvt.s32.f32 %v861
      %v878 = vcvt.s32.f32 %v862
      %v879 = vcvt.s32.f32 %v863
      %v880 = vcvt.s32.f32 %v864
      %v881 = vadd.f32 %v865, %v866
      %v882 = vadd.f32 %v881, %v867
      %v883 = vadd.f32 %v882, %v868
      %v884 = vadd.f32 %v883, %v869
      %v885 = vadd.f32 %v884, %v870
      %v886 = vadd.f32 %v885, %v871
      %v887 = vadd.f32 %v886, %v872
      %v888 = vadd.f32 %v887, %v873
      %v889 = vadd.f32 %v888, %v874
      %v890 = vadd.f32 %v889, %v875
      %v891 = vadd.f32 %v890, %v876
      %v892 = vadd.f32 %v891, %v877
      %v893 = vadd.f32 %v892, %v878
      %v894 = vadd.f32 %v893, %v879
      %v895 = vadd.f32 %v894, %v880
      %v896 = vrot.slane %v895, 4
      %v897 = vadd.f32 %v895, %v896
      %v898 = vrot.slane %v897, 2
      %v899 = vadd.f32 %v897, %v898
      %v900 = vrot.slane %v899, 1
      %v901 = vadd.f32 %v899, %v900
      %v902 = vadd.f32 %v848, %v901
      %903 = vst [vmem:[#allocation3] sm:$0x1] %v902
    $region33: #{tpu_custom_call.1} parent=1 // pred_fallthru
      _
    // Predicated region
    $region34: #{tpu_custom_call.1} parent=1 // pred_check
      %p904 = pneg %p34
    $region35: #{tpu_custom_call.1} parent=1 // pred_check_branch
      %906 = sbr.rel (%p904) target = $region37
    $region36: #{tpu_custom_call.1} parent=1 // pred_region
      %v907 = vld [vmem:[#allocation2] sm:$0x1]
      %908 = vst [vmem:[#allocation9] sm:$0x1] %v907
      %v909 = vld [vmem:[#allocation3] sm:$0x1]
      %910 = vst [vmem:[#allocation9 + $0x1] sm:$0x1] %v909
      %v911 = vld [vmem:[#allocation4] sm:$0x1]
      %912 = vst [vmem:[#allocation9 + $0x2] sm:$0x1] %v911
      %v913 = vld [vmem:[#allocation5] sm:$0x1]
      %914 = vst [vmem:[#allocation9 + $0x3] sm:$0x1] %v913
    $region37: #{tpu_custom_call.1} parent=1 // pred_fallthru
      _
    // Predicated region
    $region38: #{tpu_custom_call.1} parent=1 // pred_check
      _
    $region39: #{tpu_custom_call.1} parent=1 // pred_check_branch
      %916 = sbr.rel (0) target = $region41
    $region40: #{tpu_custom_call.1} parent=1 // pred_region
      %918 = vsyncadd [#allocation8], 0
      %s920 = sshll.u32 [#allocation9], 4
      %s921 = int_to_ptr.vmem [resolvable:$true] %s920
      %s922 = sshll.u32 %s4, 4
      %s923 = int_to_ptr.hbm [resolvable:$true] %s922
      %925 = dma.vmem_to_hbm [thread:$0]  %s921, 64, %s923, [#allocation8]
    $region41: #{tpu_custom_call.1} parent=1 // pred_fallthru
      _
    // Predicated region
    $region42: #{tpu_custom_call.1} parent=1 // pred_check
      _
    $region43: #{tpu_custom_call.1} parent=1 // pred_check_branch
      %927 = sbr.rel (0) target = $region45
    $region44: #{tpu_custom_call.1} parent=1 // pred_region
      %929 = dma.done [#allocation8], 64
    $region45: #{tpu_custom_call.1} parent=1 // pred_fallthru
      _
    %930 = vsyncpa [#allocation7], 1
    %931 = vsyncpa [#allocation8], 1

</llo_original>
